<compile_context>
chip_gen: v6e
topology: v6e:2x2x1
jax: 0.10.0
libtpu: 0.0.40
codegen_flags: <defaults>
</compile_context>

<pallas_src>
import functools
import math

import jax
import jax.numpy as jnp
from jax.experimental import pallas as pl
from jax.experimental.pallas import tpu as pltpu

# ---- model config (BERT-base head shapes, small depth/vocab/seq) -----------
B = 2          # batch
S = 8          # sequence length
H = 768        # hidden size (fixed by Linear(768, 1) in the module)
NH = 12        # attention heads
DH = H // NH   # head dim = 64
FF = 3072      # intermediate size
NUM_LAYERS = 2 # small synthetic encoder depth
VOCAB = 100
MAX_POS = 64
TYPES = 2
LN_EPS = 1e-12
VMEM_LIMIT = 32 * 1024 * 1024   # above v5e's 16 MiB scoped default, safe on v7x


# ---------------------------------------------------------------------------
# In-kernel helpers
# ---------------------------------------------------------------------------
def _gelu(y):
    # TODO(synk): pytorch_pretrained_bert uses exact erf-GELU; erf has no
    # guaranteed Pallas TPU lowering here, so the tanh approximation is used.
    return 0.5 * y * (1.0 + jnp.tanh(0.7978845608028654 *
                                     (y + 0.044715 * y * y * y)))


def _layernorm(y, gamma, beta):
    mean = jnp.mean(y, axis=-1, keepdims=True)
    c = y - mean
    var = jnp.mean(c * c, axis=-1, keepdims=True)
    inv = jax.lax.rsqrt(var + LN_EPS)
    return c * inv * gamma + beta


# ---------------------------------------------------------------------------
# Pallas kernels
# ---------------------------------------------------------------------------
def _dense_kernel(x_ref, w_ref, b_ref, o_ref, *, activation):
    """y = x @ W + b (bf16 MXU, f32 accumulation) with optional activation."""
    x = x_ref[...].astype(w_ref.dtype)
    y = jnp.dot(x, w_ref[...], preferred_element_type=jnp.float32)
    y = y + b_ref[...]
    if activation == "tanh":
        y = jnp.tanh(y)
    elif activation == "sigmoid":
        # exp on the EUP + exact reciprocal (no divide on the VALU path).
        y = pl.reciprocal(1.0 + jnp.exp(-y), approx=False)
    o_ref[...] = y


def dense(x, w, b, activation="none"):
    """x: (M, K) f32, w: (K, N) bf16, b: (N,) f32 -> (M, N) f32."""
    M, K = x.shape
    _, N = w.shape
    # Few, large lane tiles: single tile up to 768 wide; the fused QKV weight
    # (N=2304) uses 2 tiles of 1152 (even count keeps both v7x cores busy).
    if N > 1152 and N % 1152 == 0:
        tn = 1152
    else:
        tn = N
    grid = (N // tn,)
    return pl.pallas_call(
        functools.partial(_dense_kernel, activation=activation),
        out_shape=jax.ShapeDtypeStruct((M, N), jnp.float32),
        grid=grid,
        in_specs=[
            pl.BlockSpec((M, K), lambda j: (0, 0)),
            pl.BlockSpec((K, tn), lambda j: (0, j)),
            pl.BlockSpec((1, tn), lambda j: (0, j)),
        ],
        out_specs=pl.BlockSpec((M, tn), lambda j: (0, j)),
        compiler_params=pltpu.CompilerParams(
            dimension_semantics=("parallel",),
            vmem_limit_bytes=VMEM_LIMIT),
    )(x, w, b.reshape(1, N))


def _dense_ln_kernel(x_ref, w_ref, b_ref, r_ref, g_ref, bb_ref, o_ref):
    """y = LayerNorm(x @ W + b + residual) fused in one kernel."""
    x = x_ref[...].astype(w_ref.dtype)
    y = jnp.dot(x, w_ref[...], preferred_element_type=jnp.float32)
    y = y + b_ref[...] + r_ref[...]
    o_ref[...] = _layernorm(y, g_ref[...], bb_ref[...])


def dense_add_layernorm(x, w, b, residual, gamma, beta):
    M, K = x.shape
    _, N = w.shape
    return pl.pallas_call(
        _dense_ln_kernel,
        out_shape=jax.ShapeDtypeStruct((M, N), jnp.float32),
        grid=(1,),
        in_specs=[
            pl.BlockSpec((M, K), lambda i: (0, 0)),
            pl.BlockSpec((K, N), lambda i: (0, 0)),
            pl.BlockSpec((1, N), lambda i: (0, 0)),
            pl.BlockSpec((M, N), lambda i: (0, 0)),
            pl.BlockSpec((1, N), lambda i: (0, 0)),
            pl.BlockSpec((1, N), lambda i: (0, 0)),
        ],
        out_specs=pl.BlockSpec((M, N), lambda i: (0, 0)),
        compiler_params=pltpu.CompilerParams(vmem_limit_bytes=VMEM_LIMIT),
    )(x, w, b.reshape(1, N), residual,
      gamma.reshape(1, N), beta.reshape(1, N))


def _ln_kernel(x_ref, g_ref, b_ref, o_ref):
    """Plain LayerNorm (no residual stream, used for embeddings)."""
    o_ref[...] = _layernorm(x_ref[...], g_ref[...], b_ref[...])


def layernorm(x, gamma, beta):
    M, N = x.shape
    return pl.pallas_call(
        _ln_kernel,
        out_shape=jax.ShapeDtypeStruct((M, N), jnp.float32),
        grid=(1,),
        in_specs=[
            pl.BlockSpec((M, N), lambda i: (0, 0)),
            pl.BlockSpec((1, N), lambda i: (0, 0)),
            pl.BlockSpec((1, N), lambda i: (0, 0)),
        ],
        out_specs=pl.BlockSpec((M, N), lambda i: (0, 0)),
    )(x, gamma.reshape(1, N), beta.reshape(1, N))


def _ffn_kernel(x_ref, w1_ref, b1_ref, w2_ref, b2_ref, g_ref, bb_ref,
                o_ref, acc_ref):
    """Fused FFN: acc += gelu(x @ w1_chunk + b1_chunk) @ w2_chunk over FF chunks;
    final step adds b2 + residual(x) and applies LayerNorm."""
    k = pl.program_id(0)

    @pl.when(k == 0)
    def _():
        acc_ref[...] = jnp.zeros_like(acc_ref)

    x = x_ref[...]
    h = jnp.dot(x.astype(w1_ref.dtype), w1_ref[...],
                preferred_element_type=jnp.float32)
    h = _gelu(h + b1_ref[...])
    acc_ref[...] += jnp.dot(h.astype(w2_ref.dtype), w2_ref[...],
                            preferred_element_type=jnp.float32)

    @pl.when(k == pl.num_programs(0) - 1)
    def _():
        y = acc_ref[...] + b2_ref[...] + x_ref[...]   # residual = FFN input
        o_ref[...] = _layernorm(y, g_ref[...], bb_ref[...])


def ffn_add_layernorm(x, w1, b1, w2, b2, gamma, beta, *, tk=1536):
    M, K = x.shape
    Kff = w1.shape[1]
    N = w2.shape[1]
    grid = (Kff // tk,)   # 3072 / 1536 = 2 steps: even count for v7x megacore
    return pl.pallas_call(
        _ffn_kernel,
        out_shape=jax.ShapeDtypeStruct((M, N), jnp.float32),
        grid=grid,
        in_specs=[
            pl.BlockSpec((M, K), lambda k: (0, 0)),
            pl.BlockSpec((K, tk), lambda k: (0, k)),
            pl.BlockSpec((1, tk), lambda k: (0, k)),
            pl.BlockSpec((tk, N), lambda k: (k, 0)),
            pl.BlockSpec((1, N), lambda k: (0, 0)),
            pl.BlockSpec((1, N), lambda k: (0, 0)),
            pl.BlockSpec((1, N), lambda k: (0, 0)),
        ],
        out_specs=pl.BlockSpec((M, N), lambda k: (0, 0)),
        scratch_shapes=[pltpu.VMEM((M, N), jnp.float32)],
        compiler_params=pltpu.CompilerParams(
            dimension_semantics=("arbitrary",),
            vmem_limit_bytes=VMEM_LIMIT),
    )(x, w1, b1.reshape(1, Kff), w2, b2.reshape(1, N),
      gamma.reshape(1, N), beta.reshape(1, N))


def _attn_kernel(q_ref, k_ref, v_ref, m_ref, o_ref, *, scale, nh, dh):
    """Per-batch multi-head softmax attention with in-kernel head merge.

    Writes a lane-dense (S, NH*DH) = (8, 768) row block."""
    q = q_ref[0]          # (NH, S, DH)
    k = k_ref[0]          # (NH, S, DH)
    v = v_ref[0]          # (NH, S, DH)
    mask_add = m_ref[0]   # (1, 1, S) additive mask, broadcasts over heads/query
    s = jnp.einsum("hqd,hkd->hqk", q, k,
                   preferred_element_type=jnp.float32) * scale
    s = s + mask_add
    m = jnp.max(s, axis=-1, keepdims=True)
    p = jnp.exp(s - m)
    # EUP approximate reciprocal instead of a divide on the VALU path.
    p = p * pl.reciprocal(jnp.sum(p, axis=-1, keepdims=True), approx=True)
    ctx = jnp.einsum("hqk,hkd->hqd", p, v,
                     preferred_element_type=jnp.float32)   # (NH, S, DH)
    # Merge heads into the lane-dense output tile (static column slices).
    for h in range(nh):
        o_ref[:, h * dh:(h + 1) * dh] = ctx[h]


def attention(q, k, v, mask_add):
    """q/k/v: (B, NH, S, DH) -> (B*S, H) flat, lane-dense output."""
    Bsz, nh, seq, dh = q.shape
    scale = 1.0 / math.sqrt(dh)
    qkv_spec = pl.BlockSpec((1, nh, seq, dh), lambda b: (b, 0, 0, 0))
    m_spec = pl.BlockSpec((1, 1, 1, seq), lambda b: (b, 0, 0, 0))
    return pl.pallas_call(
        functools.partial(_attn_kernel, scale=scale, nh=nh, dh=dh),
        out_shape=jax.ShapeDtypeStruct((Bsz * seq, nh * dh), jnp.float32),
        grid=(Bsz,),
        in_specs=[qkv_spec, qkv_spec, qkv_spec, m_spec],
        out_specs=pl.BlockSpec((seq, nh * dh), lambda b: (b, 0)),
        compiler_params=pltpu.CompilerParams(
            dimension_semantics=("parallel",)),
    )(q, k, v, mask_add)


# ---------------------------------------------------------------------------
# Model glue (plain JAX: embeddings gather, head split, layer loop)
# ---------------------------------------------------------------------------
def encoder_layer(x_flat, p, mask_add, Bsz, seq):
    # Fused Q/K/V projection: one (768, 2304) matmul, one pallas_call.
    qkv = dense(x_flat, p["wqkv"], p["bqkv"])            # (B*S, 3H)
    qkv = qkv.reshape(Bsz, seq, 3, NH, DH)
    q = qkv[:, :, 0].transpose(0, 2, 1, 3)               # (B, NH, S, DH)
    k = qkv[:, :, 1].transpose(0, 2, 1, 3)
    v = qkv[:, :, 2].transpose(0, 2, 1, 3)

    ctx = attention(q, k, v, mask_add)                    # (B*S, H)

    # Attention output projection with fused residual-add + LayerNorm.
    x1 = dense_add_layernorm(ctx, p["wo"], p["bo"], x_flat,
                             p["ln1_g"], p["ln1_b"])

    # Fused FFN (up + GELU + down) with residual-add + LayerNorm epilogue.
    x2 = ffn_add_layernorm(x1, p["w1"], p["b1"], p["w2"], p["b2"],
                           p["ln2_g"], p["ln2_b"])
    return x2


def bert_binary_classifier(params, tokens, masks):
    Bsz, seq = tokens.shape
    masks = masks.astype(jnp.float32)
    # BERT-style additive attention mask: (1 - mask) * -10000
    mask_add = ((1.0 - masks) * -10000.0).reshape(Bsz, 1, 1, seq)

    pos_ids = jnp.arange(seq)
    emb = (params["word_emb"][tokens]
           + params["pos_emb"][pos_ids][None, :, :]
           + params["type_emb"][0][None, None, :])
    x = emb.reshape(Bsz * seq, H)
    x = layernorm(x, params["emb_ln_g"], params["emb_ln_b"])

    for lp in params["layers"]:
        x = encoder_layer(x, lp, mask_add, Bsz, seq)

    # Pooler: tanh(Linear(CLS token))
    cls = x.reshape(Bsz, seq, H)[:, 0, :]
    pooled = dense(cls, params["pool_w"], params["pool_b"], activation="tanh")

    # nn.Dropout(0.1) is identity at inference (eval mode).
    dropout_output = pooled

    # Linear(768, 1) + Sigmoid, fused in one Pallas kernel.
    proba = dense(dropout_output, params["cls_w"], params["cls_b"],
                  activation="sigmoid")
    return proba


def init_params(key):
    n_keys = 5 + 6 * NUM_LAYERS
    keys = iter(jax.random.split(key, n_keys))

    def nrm(shape, dtype=jnp.float32):
        w = 0.02 * jax.random.normal(next(keys), shape, dtype=jnp.float32)
        return w.astype(dtype)

    wdt = jnp.bfloat16   # matmul weights streamed as bf16 (f32 accumulation)

    params = {
        "word_emb": nrm((VOCAB, H)),
        "pos_emb": nrm((MAX_POS, H)),
        "type_emb": nrm((TYPES, H)),
        "emb_ln_g": jnp.ones((H,), jnp.float32),
        "emb_ln_b": jnp.zeros((H,), jnp.float32),
        "layers": [],
    }
    for _ in range(NUM_LAYERS):
        wq = nrm((H, H), wdt)
        wk = nrm((H, H), wdt)
        wv = nrm((H, H), wdt)
        params["layers"].append({
            "wqkv": jnp.concatenate([wq, wk, wv], axis=1),   # (H, 3H) bf16
            "bqkv": jnp.zeros((3 * H,), jnp.float32),
            "wo": nrm((H, H), wdt), "bo": jnp.zeros((H,), jnp.float32),
            "ln1_g": jnp.ones((H,), jnp.float32),
            "ln1_b": jnp.zeros((H,), jnp.float32),
            "w1": nrm((H, FF), wdt), "b1": jnp.zeros((FF,), jnp.float32),
            "w2": nrm((FF, H), wdt), "b2": jnp.zeros((H,), jnp.float32),
            "ln2_g": jnp.ones((H,), jnp.float32),
            "ln2_b": jnp.zeros((H,), jnp.float32),
        })
    params["pool_w"] = nrm((H, H), wdt)
    params["pool_b"] = jnp.zeros((H,), jnp.float32)
    params["cls_w"] = nrm((H, 1), wdt)
    params["cls_b"] = jnp.zeros((1,), jnp.float32)
    return params


if __name__ == "__main__":
    key = jax.random.PRNGKey(0)
    k_tok, k_par = jax.random.split(key)

    tokens = jax.random.randint(k_tok, (B, S), 0, VOCAB, dtype=jnp.int32)
    masks = jnp.ones((B, S), jnp.float32).at[:, S - 2:].set(0.0)  # pad last 2

    params = init_params(k_par)
    proba = bert_binary_classifier(params, tokens, masks)
    proba = jax.block_until_ready(proba)

    assert proba.shape == (B, 1), proba.shape
    assert bool(jnp.all((proba >= 0.0) & (proba <= 1.0)))
    print("KERNEL_OK")
</pallas_src>

<mosaic_0001>
module attributes {stable_mosaic.version = 11 : i64} {
  func.func @_ln_kernel(%arg0: i32, %arg1: memref<16x768xf32, #tpu.memory_space<vmem>>, %arg2: memref<1x768xf32, #tpu.memory_space<vmem>>, %arg3: memref<1x768xf32, #tpu.memory_space<vmem>>, %arg4: memref<16x768xf32, #tpu.memory_space<vmem>>) attributes {dimension_semantics = [#tpu.dimension_semantics<arbitrary>], iteration_bounds = array<i64: 1>, scalar_prefetch = 0 : i64, scratch_operands = 0 : i64, tpu.core_type = #tpu.core_type<tc>, window_params = [{pipeline_mode = #tpu.pipeline_mode<synchronous>, transform_indices = @transform_0, window_bounds = array<i64: 16, 768>}, {pipeline_mode = #tpu.pipeline_mode<synchronous>, transform_indices = @transform_1, window_bounds = array<i64: 1, 768>}, {pipeline_mode = #tpu.pipeline_mode<synchronous>, transform_indices = @transform_2, window_bounds = array<i64: 1, 768>}, {pipeline_mode = #tpu.pipeline_mode<synchronous>, transform_indices = @transform_3, window_bounds = array<i64: 16, 768>}]} {
    %c0 = arith.constant 0 : index
    %c0_0 = arith.constant 0 : index
    %0 = vector.load %arg1[%c0, %c0_0] : memref<16x768xf32, #tpu.memory_space<vmem>>, vector<16x768xf32>
    %c0_1 = arith.constant 0 : index
    %c0_2 = arith.constant 0 : index
    %1 = vector.load %arg2[%c0_1, %c0_2] : memref<1x768xf32, #tpu.memory_space<vmem>>, vector<1x768xf32>
    %c0_3 = arith.constant 0 : index
    %c0_4 = arith.constant 0 : index
    %2 = vector.load %arg3[%c0_3, %c0_4] : memref<1x768xf32, #tpu.memory_space<vmem>>, vector<1x768xf32>
    %cst = arith.constant dense<0.000000e+00> : vector<16xf32>
    %3 = vector.multi_reduction <add>, %0, %cst [1] : vector<16x768xf32> to vector<16xf32>
    %4 = vector.shape_cast %3 : vector<16xf32> to vector<16x1xf32>
    %cst_5 = arith.constant 7.680000e+02 : f32
    %5 = vector.broadcast %cst_5 : f32 to vector<16x1xf32>
    %6 = arith.divf %4, %5 : vector<16x1xf32>
    %7 = vector.broadcast %6 : vector<16x1xf32> to vector<16x768xf32>
    %8 = arith.subf %0, %7 : vector<16x768xf32>
    %9 = arith.mulf %8, %8 : vector<16x768xf32>
    %cst_6 = arith.constant dense<0.000000e+00> : vector<16xf32>
    %10 = vector.multi_reduction <add>, %9, %cst_6 [1] : vector<16x768xf32> to vector<16xf32>
    %11 = vector.shape_cast %10 : vector<16xf32> to vector<16x1xf32>
    %cst_7 = arith.constant 7.680000e+02 : f32
    %12 = vector.broadcast %cst_7 : f32 to vector<16x1xf32>
    %13 = arith.divf %11, %12 : vector<16x1xf32>
    %cst_8 = arith.constant 9.99999996E-13 : f32
    %14 = vector.broadcast %cst_8 : f32 to vector<16x1xf32>
    %15 = arith.addf %13, %14 : vector<16x1xf32>
    %16 = math.rsqrt %15 : vector<16x1xf32>
    %17 = vector.broadcast %16 : vector<16x1xf32> to vector<16x768xf32>
    %18 = arith.mulf %8, %17 : vector<16x768xf32>
    %19 = vector.broadcast %1 : vector<1x768xf32> to vector<16x768xf32>
    %20 = arith.mulf %18, %19 : vector<16x768xf32>
    %21 = vector.broadcast %2 : vector<1x768xf32> to vector<16x768xf32>
    %22 = arith.addf %20, %21 : vector<16x768xf32>
    %c0_9 = arith.constant 0 : index
    %c0_10 = arith.constant 0 : index
    %23 = vector.load %arg4[%c0_9, %c0_10] : memref<16x768xf32, #tpu.memory_space<vmem>>, vector<16x768xf32>
    tpu.vector_store %arg4[%c0_9, %c0_10], %22 {strides = array<i32>} : memref<16x768xf32, #tpu.memory_space<vmem>>, vector<16x768xf32>,
    return
  }
  func.func @transform_0(%arg0: i32) -> (i32, i32) {
    %c0_i32 = arith.constant 0 : i32
    %c0_i32_0 = arith.constant 0 : i32
    %c0_i32_1 = arith.constant 0 : i32
    return %c0_i32, %c0_i32_0 : i32, i32
  }
  func.func @transform_1(%arg0: i32) -> (i32, i32) {
    %c0_i32 = arith.constant 0 : i32
    %c0_i32_0 = arith.constant 0 : i32
    %c0_i32_1 = arith.constant 0 : i32
    return %c0_i32, %c0_i32_0 : i32, i32
  }
  func.func @transform_2(%arg0: i32) -> (i32, i32) {
    %c0_i32 = arith.constant 0 : i32
    %c0_i32_0 = arith.constant 0 : i32
    %c0_i32_1 = arith.constant 0 : i32
    return %c0_i32, %c0_i32_0 : i32, i32
  }
  func.func @transform_3(%arg0: i32) -> (i32, i32) {
    %c0_i32 = arith.constant 0 : i32
    %c0_i32_0 = arith.constant 0 : i32
    %c0_i32_1 = arith.constant 0 : i32
    return %c0_i32, %c0_i32_0 : i32, i32
  }
}

</mosaic_0001>

<llo_original>
// kernel: tpu_custom_call.1
$region0: #{tpu_custom_call.1}
  #allocation0 [shape = 'u32[]', space=smem, size = 0x4, offset = 0x4, fixed_abs, tag = 'smem constant byte address 0x4 - core index']
  #allocation1 [shape = 'u32[144,128]{1,0:T(1,128)}', space=vmem, size = 0x12000, scoped, tag = 'internal scratch']
  %s0 = inlined_call_operand.hbm [shape: f32[16,768], index: 0, kind: input, shape index: {}]
  %s1 = inlined_call_operand.hbm [shape: f32[1,768], index: 1, kind: input, shape index: {}]
  %s2 = inlined_call_operand.hbm [shape: f32[1,768], index: 2, kind: input, shape index: {}]
  %s3 = inlined_call_operand.hbm [shape: f32[16,768], index: 3, kind: output, shape index: {}]
  %s4 = sld [smem:[#allocation0]]
  $region34: #{tpu_custom_call.1} parent=0
    _
  %s6 = ssub.s32 1, %s4
  %s7 = scalar_select 0, %s6, %s4
  $region1: #{tpu_custom_call.1} parent=0
    #allocation2 [shape = 'u8[49152]{0}', space=vmem, size = 0xc000, scoped, tag = 'input window, operand 0, single buffered']
    #allocation3 [shape = 's32[1]{0}', space=sflag, size = 0x4, scoped, tag = 'scoped memory for tpu_custom_call.1']
    #allocation4 [shape = 's32[1]{0}', space=sflag, size = 0x4, scoped, tag = 'scoped memory for tpu_custom_call.1']
    #allocation5 [shape = 'u8[3072]{0}', space=vmem, size = 0xc00, scoped, tag = 'input window, operand 1, single buffered']
    #allocation6 [shape = 's32[1]{0}', space=sflag, size = 0x4, scoped, tag = 'scoped memory for tpu_custom_call.1']
    #allocation7 [shape = 'u8[3072]{0}', space=vmem, size = 0xc00, scoped, tag = 'input window, operand 2, single buffered']
    #allocation8 [shape = 'u8[49152]{0}', space=vmem, size = 0xc000, scoped, tag = 'output window, operand 0, single buffered']
    %8 = vsyncpa [#allocation3], 0
    %9 = vsyncpa [#allocation6], 0
    %10 = vsyncpa [#allocation4], 0
    // Predicated region
    $region2: #{tpu_custom_call.1} parent=1 // pred_check
      _
    $region3: #{tpu_custom_call.1} parent=1 // pred_check_branch
      %12 = sbr.rel (0) target = $region5
    $region4: #{tpu_custom_call.1} parent=1 // pred_region
      %s14 = ssub.s32 1536, 1536
      %15 = vsyncadd [#allocation3], %s14
      %s16 = sshll.u32 [#allocation2], 4
      %s17 = int_to_ptr.vmem [resolvable:$true] %s16
      %22 = dma.hbm_to_vmem [thread:$0]  %s0, 1536, %s17, [#allocation3], 768, 768, 48
    $region5: #{tpu_custom_call.1} parent=1 // pred_fallthru
      _
    // Predicated region
    $region6: #{tpu_custom_call.1} parent=1 // pred_check
      _
    $region7: #{tpu_custom_call.1} parent=1 // pred_check_branch
      %24 = sbr.rel (0) target = $region9
    $region8: #{tpu_custom_call.1} parent=1 // pred_region
      %s26 = ssub.s32 96, 96
      %27 = vsyncadd [#allocation6], %s26
      %s29 = sshll.u32 [#allocation5], 4
      %s30 = int_to_ptr.vmem [resolvable:$true] %s29
      %32 = dma.hbm_to_vmem [thread:$0]  %s1, 96, %s30, [#allocation6]
    $region9: #{tpu_custom_call.1} parent=1 // pred_fallthru
      _
    // Predicated region
    $region10: #{tpu_custom_call.1} parent=1 // pred_check
      _
    $region11: #{tpu_custom_call.1} parent=1 // pred_check_branch
      %34 = sbr.rel (0) target = $region13
    $region12: #{tpu_custom_call.1} parent=1 // pred_region
      %s36 = ssub.s32 96, 96
      %37 = vsyncadd [#allocation6], %s36
      %s39 = sshll.u32 [#allocation7], 4
      %s40 = int_to_ptr.vmem [resolvable:$true] %s39
      %42 = dma.hbm_to_vmem [thread:$0]  %s2, 96, %s40, [#allocation6]
    $region13: #{tpu_custom_call.1} parent=1 // pred_fallthru
      _
    // Predicated region
    $region14: #{tpu_custom_call.1} parent=1 // pred_check
      _
    $region15: #{tpu_custom_call.1} parent=1 // pred_check_branch
      %44 = sbr.rel (0) target = $region17
    $region16: #{tpu_custom_call.1} parent=1 // pred_region
      %45 = dma.done [#allocation3], 1536
    $region17: #{tpu_custom_call.1} parent=1 // pred_fallthru
      _
    // Predicated region
    $region18: #{tpu_custom_call.1} parent=1 // pred_check
      _
    $region19: #{tpu_custom_call.1} parent=1 // pred_check_branch
      %47 = sbr.rel (0) target = $region21
    $region20: #{tpu_custom_call.1} parent=1 // pred_region
      %48 = dma.done [#allocation6], 96
    $region21: #{tpu_custom_call.1} parent=1 // pred_fallthru
      _
    // Predicated region
    $region22: #{tpu_custom_call.1} parent=1 // pred_check
      _
    $region23: #{tpu_custom_call.1} parent=1 // pred_check_branch
      %50 = sbr.rel (0) target = $region25
    $region24: #{tpu_custom_call.1} parent=1 // pred_region
      %51 = dma.done [#allocation6], 96
    $region25: #{tpu_custom_call.1} parent=1 // pred_fallthru
      _
    %v52 = vld [vmem:[#allocation2] sm:$0xff]
    %v53 = vld [vmem:[#allocation2 + $0x8] sm:$0xff]
    %v54 = vld [vmem:[#allocation2 + $0x10] sm:$0xff]
    %v55 = vld [vmem:[#allocation2 + $0x18] sm:$0xff]
    %v56 = vld [vmem:[#allocation2 + $0x20] sm:$0xff]
    %v57 = vld [vmem:[#allocation2 + $0x28] sm:$0xff]
    %v58 = vld [vmem:[#allocation2 + $0x30] sm:$0xff]
    %v59 = vld [vmem:[#allocation2 + $0x38] sm:$0xff]
    %v60 = vld [vmem:[#allocation2 + $0x40] sm:$0xff]
    %v61 = vld [vmem:[#allocation2 + $0x48] sm:$0xff]
    %v62 = vld [vmem:[#allocation2 + $0x50] sm:$0xff]
    %v63 = vld [vmem:[#allocation2 + $0x58] sm:$0xff]
    %v64 = vld [vmem:[#allocation5] sm:$0x3f]
    %v65 = vld [vmem:[#allocation7] sm:$0x3f]
    %v66 = vadd.f32 %v52, %v53
    %v67 = vadd.f32 %v66, %v54
    %v68 = vadd.f32 %v67, %v55
    %v69 = vadd.f32 %v68, %v56
    %v70 = vadd.f32 %v69, %v57
    %71 = vadd.xlane.f32.xlu0 %v70
    %v72 = vpop.xlane.xlu0 %71
    %v73 = vadd.f32 %v58, %v59
    %v74 = vadd.f32 %v73, %v60
    %v75 = vadd.f32 %v74, %v61
    %v76 = vadd.f32 %v75, %v62
    %v77 = vadd.f32 %v76, %v63
    %78 = vadd.xlane.f32.xlu0 %v77
    %v79 = vpop.xlane.xlu0 %78
    %v80 = vrcp.pop 768.0
    %v81 = vmul.f32 %v72, %v80
    %v82 = vmul.f32 %v79, %v80
    %v83 = vsub.f32 %v52, %v81
    %v84 = vsub.f32 %v53, %v81
    %v85 = vsub.f32 %v54, %v81
    %v86 = vsub.f32 %v55, %v81
    %v87 = vsub.f32 %v56, %v81
    %v88 = vsub.f32 %v57, %v81
    %v89 = vsub.f32 %v58, %v82
    %v90 = vsub.f32 %v59, %v82
    %v91 = vsub.f32 %v60, %v82
    %v92 = vsub.f32 %v61, %v82
    %v93 = vsub.f32 %v62, %v82
    %v94 = vsub.f32 %v63, %v82
    %v95 = vmul.f32 %v83, %v83
    %v96 = vmul.f32 %v84, %v84
    %v97 = vmul.f32 %v85, %v85
    %v98 = vmul.f32 %v86, %v86
    %v99 = vmul.f32 %v87, %v87
    %v100 = vmul.f32 %v88, %v88
    %v101 = vmul.f32 %v89, %v89
    %v102 = vmul.f32 %v90, %v90
    %v103 = vmul.f32 %v91, %v91
    %v104 = vmul.f32 %v92, %v92
    %v105 = vmul.f32 %v93, %v93
    %v106 = vmul.f32 %v94, %v94
    %v107 = vadd.f32 %v95, %v96
    %v108 = vadd.f32 %v107, %v97
    %v109 = vadd.f32 %v108, %v98
    %v110 = vadd.f32 %v109, %v99
    %v111 = vadd.f32 %v110, %v100
    %112 = vadd.xlane.f32.xlu0 %v111
    %v113 = vpop.xlane.xlu0 %112
    %v114 = vadd.f32 %v101, %v102
    %v115 = vadd.f32 %v114, %v103
    %v116 = vadd.f32 %v115, %v104
    %v117 = vadd.f32 %v116, %v105
    %v118 = vadd.f32 %v117, %v106
    %119 = vadd.xlane.f32.xlu0 %v118
    %v120 = vpop.xlane.xlu0 %119
    %v121 = vmul.f32 %v113, %v80
    %v122 = vmul.f32 %v120, %v80
    %v123 = vadd.f32 %v121, 1e-12
    %v124 = vadd.f32 %v122, 1e-12
    %v125 = vrsqrt.pop %v123
    %v126 = vrsqrt.pop %v124
    %v127 = vmul.f32 %v83, %v125
    %v128 = vmul.f32 %v84, %v125
    %v129 = vmul.f32 %v85, %v125
    %v130 = vmul.f32 %v86, %v125
    %v131 = vmul.f32 %v87, %v125
    %v132 = vmul.f32 %v88, %v125
    %v133 = vmul.f32 %v89, %v126
    %v134 = vmul.f32 %v90, %v126
    %v135 = vmul.f32 %v91, %v126
    %v136 = vmul.f32 %v92, %v126
    %v137 = vmul.f32 %v93, %v126
    %v138 = vmul.f32 %v94, %v126
    %v140 = vlaneseq
    %v141 = vshrl.u32 %v140, 7
    %v142 = vsub.s32 0, %v141
    %v143 = vrot.slane %v64, %v142
    %v144 = vlaneseq
    %v145 = vshrl.u32 %v144, 7
    %v146 = vsub.s32 1, %v145
    %v147 = vrot.slane %v64, %v146
    %v148 = vlaneseq
    %v149 = vshrl.u32 %v148, 7
    %v150 = vsub.s32 2, %v149
    %v151 = vrot.slane %v64, %v150
    %v152 = vlaneseq
    %v153 = vshrl.u32 %v152, 7
    %v154 = vsub.s32 3, %v153
    %v155 = vrot.slane %v64, %v154
    %v156 = vlaneseq
    %v157 = vshrl.u32 %v156, 7
    %v158 = vsub.s32 4, %v157
    %v159 = vrot.slane %v64, %v158
    %v160 = vlaneseq
    %v161 = vshrl.u32 %v160, 7
    %v162 = vsub.s32 5, %v161
    %v163 = vrot.slane %v64, %v162
    %v170 = vmul.f32 %v127, %v143
    %v171 = vmul.f32 %v128, %v147
    %v172 = vmul.f32 %v129, %v151
    %v173 = vmul.f32 %v130, %v155
    %v174 = vmul.f32 %v131, %v159
    %v175 = vmul.f32 %v132, %v163
    %v176 = vmul.f32 %v133, %v143
    %v177 = vmul.f32 %v134, %v147
    %v178 = vmul.f32 %v135, %v151
    %v179 = vmul.f32 %v136, %v155
    %v180 = vmul.f32 %v137, %v159
    %v181 = vmul.f32 %v138, %v163
    %v183 = vlaneseq
    %v184 = vshrl.u32 %v183, 7
    %v185 = vsub.s32 0, %v184
    %v186 = vrot.slane %v65, %v185
    %v187 = vlaneseq
    %v188 = vshrl.u32 %v187, 7
    %v189 = vsub.s32 1, %v188
    %v190 = vrot.slane %v65, %v189
    %v191 = vlaneseq
    %v192 = vshrl.u32 %v191, 7
    %v193 = vsub.s32 2, %v192
    %v194 = vrot.slane %v65, %v193
    %v195 = vlaneseq
    %v196 = vshrl.u32 %v195, 7
    %v197 = vsub.s32 3, %v196
    %v198 = vrot.slane %v65, %v197
    %v199 = vlaneseq
    %v200 = vshrl.u32 %v199, 7
    %v201 = vsub.s32 4, %v200
    %v202 = vrot.slane %v65, %v201
    %v203 = vlaneseq
    %v204 = vshrl.u32 %v203, 7
    %v205 = vsub.s32 5, %v204
    %v206 = vrot.slane %v65, %v205
    %v213 = vadd.f32 %v170, %v186
    %v214 = vadd.f32 %v171, %v190
    %v215 = vadd.f32 %v172, %v194
    %v216 = vadd.f32 %v173, %v198
    %v217 = vadd.f32 %v174, %v202
    %v218 = vadd.f32 %v175, %v206
    %v219 = vadd.f32 %v176, %v186
    %v220 = vadd.f32 %v177, %v190
    %v221 = vadd.f32 %v178, %v194
    %v222 = vadd.f32 %v179, %v198
    %v223 = vadd.f32 %v180, %v202
    %v224 = vadd.f32 %v181, %v206
    %225 = vst [vmem:[#allocation8] sm:$0xff] %v213
    %226 = vst [vmem:[#allocation8 + $0x8] sm:$0xff] %v214
    %227 = vst [vmem:[#allocation8 + $0x10] sm:$0xff] %v215
    %228 = vst [vmem:[#allocation8 + $0x18] sm:$0xff] %v216
    %229 = vst [vmem:[#allocation8 + $0x20] sm:$0xff] %v217
    %230 = vst [vmem:[#allocation8 + $0x28] sm:$0xff] %v218
    %231 = vst [vmem:[#allocation8 + $0x30] sm:$0xff] %v219
    %232 = vst [vmem:[#allocation8 + $0x38] sm:$0xff] %v220
    %233 = vst [vmem:[#allocation8 + $0x40] sm:$0xff] %v221
    %234 = vst [vmem:[#allocation8 + $0x48] sm:$0xff] %v222
    %235 = vst [vmem:[#allocation8 + $0x50] sm:$0xff] %v223
    %236 = vst [vmem:[#allocation8 + $0x58] sm:$0xff] %v224
    // Predicated region
    $region26: #{tpu_custom_call.1} parent=1 // pred_check
      _
    $region27: #{tpu_custom_call.1} parent=1 // pred_check_branch
      %238 = sbr.rel (0) target = $region29
    $region28: #{tpu_custom_call.1} parent=1 // pred_region
      %s240 = ssub.s32 1536, 1536
      %241 = vsyncadd [#allocation4], %s240
      %s242 = sshll.u32 [#allocation8], 4
      %s243 = int_to_ptr.vmem [resolvable:$true] %s242
      %248 = dma.vmem_to_hbm [thread:$0]  %s243, 1536, %s3, [#allocation4], 768, 768, 48
    $region29: #{tpu_custom_call.1} parent=1 // pred_fallthru
      _
    // Predicated region
    $region30: #{tpu_custom_call.1} parent=1 // pred_check
      _
    $region31: #{tpu_custom_call.1} parent=1 // pred_check_branch
      %250 = sbr.rel (0) target = $region33
    $region32: #{tpu_custom_call.1} parent=1 // pred_region
      %251 = dma.done [#allocation4], 1536
    $region33: #{tpu_custom_call.1} parent=1 // pred_fallthru
      _
    %252 = vsyncpa [#allocation3], 1
    %253 = vsyncpa [#allocation6], 1
    %254 = vsyncpa [#allocation4], 1

</llo_original>
